<compile_context>
chip_gen: v7x
topology: tpu7x:2x2x1
jax: 0.10.0
libtpu: 0.0.40
codegen_flags: <defaults>
</compile_context>

<pallas_src>
import functools

import jax
import jax.numpy as jnp
from jax import lax
from jax.experimental import pallas as pl
from jax.experimental.pallas import tpu as pltpu


# ----------------------------- Pallas kernel -------------------------------
def _conv3x3_relu_kernel(x_ref, w_ref, b_ref, o_ref, *, tap_offsets, m_out):
    # x_ref: (Cin, L)        bf16  flattened zero-padded image plane, 1 sample
    #                              L = (H+2)*(W+2) + 2 (1-elem guard each end)
    # w_ref: (Cout, 9*Cin)   bf16  fused weights, column k = t*Cin + c,
    #                              tap t = dy*3 + dx
    # b_ref: (Cout, 1)       f32   bias column (broadcasts along lanes)
    # o_ref: (Cout, m_out)   bf16  m_out = H*(W+2)  (lane-dense spatial axis)
    xv = x_ref[...]                                    # single VMEM read
    # Stack the 9 shifted windows along the contraction axis.  This is
    # VMEM-only data movement (lane shifts + sublane concat) -- no HBM
    # duplication.  Row index of `stacked` = t*Cin + c, matching w_ref cols.
    stacked = jnp.concatenate(
        [xv[:, off:off + m_out] for off in tap_offsets], axis=0)
    acc = jnp.dot(w_ref[...], stacked,                 # one MXU dot, K = 9*Cin
                  preferred_element_type=jnp.float32)
    acc = acc + b_ref[...]                             # single bias add
    o_ref[...] = jnp.maximum(acc, 0.0).astype(o_ref.dtype)


def conv3x3_relu_pallas(x_nchw, weight, bias):
    """Conv2d(k=3, stride=1, pad=1) + ReLU, matching nn.Conv2d semantics.

    x_nchw: (N, Cin, H, W) float32
    weight: (Cout, Cin, 3, 3) float32 (PyTorch OIHW layout)
    bias:   (Cout,) float32
    returns (N, Cout, H, W) bfloat16
    """
    N, Cin, H, W = x_nchw.shape
    Cout = weight.shape[0]
    P = W + 2                       # padded row width (output row stride too)
    Hp = H + 2
    m_out = H * P                   # flattened (wide) output pixels per sample
    L = Hp * P + 2                  # flattened padded plane + 1-elem guards

    # ---- host-side layout prep: cast to bf16 FIRST, then pad; no im2col,
    # ---- no transposes -- activations cross HBM once at half width.
    x_bf = x_nchw.astype(jnp.bfloat16)
    x_pad = jnp.pad(x_bf, ((0, 0), (0, 0), (1, 1), (1, 1)))       # (N,Cin,Hp,P)
    x_flat = x_pad.reshape(N, Cin, Hp * P)
    x_flat = jnp.pad(x_flat, ((0, 0), (0, 0), (1, 1)))            # guard elems

    # weight (Cout,Cin,3,3) -> (Cout, 9*Cin): column k = (dy*3+dx)*Cin + c.
    w_fused = jnp.transpose(weight, (0, 2, 3, 1)).reshape(Cout, 9 * Cin)
    w_fused = w_fused.astype(jnp.bfloat16)
    b_col = bias.reshape(Cout, 1).astype(jnp.float32)

    # With the +1 front guard, tap (dy, dx) reads window [off, off + m_out)
    # where off = dy*P + dx, and output flat index q = i*P + j is the conv
    # result at pixel (i, j-1); columns j=0 and j=P-1 wrap across rows and
    # MUST be discarded by the final slice (never consume out_wide raw).
    tap_offsets = tuple(dy * P + dx for dy in range(3) for dx in range(3))

    kernel = functools.partial(
        _conv3x3_relu_kernel, tap_offsets=tap_offsets, m_out=m_out)

    flops = 2 * N * m_out * 9 * Cin * Cout
    bytes_accessed = (N * Cin * L * 2 + 9 * Cin * Cout * 2 + Cout * 4
                      + N * Cout * m_out * 2)

    # VMEM budget: double-buffered in/out tiles + weights/bias + in-kernel
    # stacked windows + f32 accumulator, with 4x headroom (not hard-coded).
    tile_bytes = ((Cin * L * 2 + Cout * m_out * 2) * 2
                  + (9 * Cin * Cout * 2 + Cout * 4) * 2
                  + 9 * Cin * m_out * 2 + Cout * m_out * 4)
    vmem_limit = int(min(max(4 * tile_bytes, 16 * 1024 * 1024),
                         64 * 1024 * 1024))

    out_wide = pl.pallas_call(
        kernel,
        out_shape=jax.ShapeDtypeStruct((N, Cout, m_out), jnp.bfloat16),
        grid_spec=pltpu.PrefetchScalarGridSpec(
            num_scalar_prefetch=0,
            grid=(N,),
            in_specs=[
                pl.BlockSpec((None, Cin, L), lambda n: (n, 0, 0)),   # plane
                pl.BlockSpec((Cout, 9 * Cin), lambda n: (0, 0)),     # weights
                pl.BlockSpec((Cout, 1), lambda n: (0, 0)),           # bias col
            ],
            out_specs=pl.BlockSpec((None, Cout, m_out), lambda n: (n, 0, 0)),
        ),
        compiler_params=pltpu.CompilerParams(
            dimension_semantics=("parallel",),
            vmem_limit_bytes=vmem_limit,
        ),
        cost_estimate=pl.CostEstimate(
            flops=flops, transcendentals=0, bytes_accessed=bytes_accessed),
    )(x_flat, w_fused, b_col)

    # (N, Cout, H*P) -> (N, Cout, H, P) -> drop the two wrap columns (bf16,
    # cheap).  TODO(synk): when H*(W+2) is a multiple of 128 the wide lane
    # axis gives fully unmasked stores; optionally pad P up to achieve this.
    out = out_wide.reshape(N, Cout, H, P)[:, :, :, 1:W + 1]
    return out   # NCHW bf16, no transpose needed


# ----------------------------- Encoder wrapper ------------------------------
class EncoderPallas:
    """Mirror of the PyTorch Encoder: forward(x) = backend(x)."""

    def __init__(self, backend_fn):
        self.model1 = backend_fn

    def __call__(self, x):
        return self.model1(x)


def make_synthetic_backend(cin, cout, key):
    """Deterministic Conv2d(3x3, pad=1) + ReLU backend parameters."""
    kw_, kb_ = jax.random.split(key)
    fan_in = cin * 3 * 3
    bound = 1.0 / jnp.sqrt(fan_in)
    weight = jax.random.uniform(kw_, (cout, cin, 3, 3), jnp.float32, -bound, bound)
    bias = jax.random.uniform(kb_, (cout,), jnp.float32, -bound, bound)

    backend = jax.jit(lambda x: conv3x3_relu_pallas(x, weight, bias))
    return backend, weight, bias


# --------------------------------- main -------------------------------------
if __name__ == "__main__":
    N, Cin, H, W = 2, 4, 16, 16
    Cout = 8

    key = jax.random.PRNGKey(0)
    kx, kparam = jax.random.split(key)
    x = jax.random.normal(kx, (N, Cin, H, W), jnp.float32)

    backend, weight, bias = make_synthetic_backend(Cin, Cout, kparam)
    encoder = EncoderPallas(backend)

    out = encoder(x)
    out = jax.block_until_ready(out)

    # Reference (same bf16 rounding of activations/weights, f32 accumulation).
    xq = x.astype(jnp.bfloat16).astype(jnp.float32)
    wq = weight.astype(jnp.bfloat16).astype(jnp.float32)
    ref = lax.conv_general_dilated(
        xq, wq, window_strides=(1, 1), padding="SAME",
        dimension_numbers=("NCHW", "OIHW", "NCHW"),
    ) + bias.reshape(1, Cout, 1, 1)
    ref = jnp.maximum(ref, 0.0)

    assert out.shape == (N, Cout, H, W), out.shape
    assert out.dtype == jnp.bfloat16, out.dtype
    out_f32 = out.astype(jnp.float32)
    err = float(jnp.max(jnp.abs(out_f32 - ref)))
    # Output is stored in bf16, so allow ~1 bf16 ulp of slack vs the f32 ref.
    assert jnp.allclose(out_f32, ref, atol=3e-2, rtol=3e-2), err

    print("KERNEL_OK")
</pallas_src>

<mosaic_0001>
module attributes {stable_mosaic.version = 11 : i64} {
  func.func @_conv3x3_relu_kernel(%arg0: i32, %arg1: memref<1x4x326xbf16, #tpu.memory_space<vmem>>, %arg2: memref<8x36xbf16, #tpu.memory_space<vmem>>, %arg3: memref<8x1xf32, #tpu.memory_space<vmem>>, %arg4: memref<1x8x288xbf16, #tpu.memory_space<vmem>>) attributes {dimension_semantics = [#tpu.dimension_semantics<parallel>], iteration_bounds = array<i64: 2>, scalar_prefetch = 0 : i64, scratch_operands = 0 : i64, tpu.core_type = #tpu.core_type<tc>, window_params = [{transform_indices = @transform_0, window_bounds = array<i64: 1, 4, 326>}, {pipeline_mode = #tpu.pipeline_mode<synchronous>, transform_indices = @transform_1, window_bounds = array<i64: 8, 36>}, {pipeline_mode = #tpu.pipeline_mode<synchronous>, transform_indices = @transform_2, window_bounds = array<i64: 8, 1>}, {transform_indices = @transform_3, window_bounds = array<i64: 1, 8, 288>}]} {
    %c0 = arith.constant 0 : index
    %c0_0 = arith.constant 0 : index
    %c0_1 = arith.constant 0 : index
    %0 = vector.load %arg1[%c0, %c0_0, %c0_1] : memref<1x4x326xbf16, #tpu.memory_space<vmem>>, vector<1x4x326xbf16>
    %1 = vector.shape_cast %0 : vector<1x4x326xbf16> to vector<4x326xbf16>
    %2 = vector.extract_strided_slice %1 {offsets = [0, 0], sizes = [4, 288], strides = [1, 1]} : vector<4x326xbf16> to vector<4x288xbf16>
    %3 = vector.extract_strided_slice %1 {offsets = [0, 1], sizes = [4, 288], strides = [1, 1]} : vector<4x326xbf16> to vector<4x288xbf16>
    %4 = vector.extract_strided_slice %1 {offsets = [0, 2], sizes = [4, 288], strides = [1, 1]} : vector<4x326xbf16> to vector<4x288xbf16>
    %5 = vector.extract_strided_slice %1 {offsets = [0, 18], sizes = [4, 288], strides = [1, 1]} : vector<4x326xbf16> to vector<4x288xbf16>
    %6 = vector.extract_strided_slice %1 {offsets = [0, 19], sizes = [4, 288], strides = [1, 1]} : vector<4x326xbf16> to vector<4x288xbf16>
    %7 = vector.extract_strided_slice %1 {offsets = [0, 20], sizes = [4, 288], strides = [1, 1]} : vector<4x326xbf16> to vector<4x288xbf16>
    %8 = vector.extract_strided_slice %1 {offsets = [0, 36], sizes = [4, 288], strides = [1, 1]} : vector<4x326xbf16> to vector<4x288xbf16>
    %9 = vector.extract_strided_slice %1 {offsets = [0, 37], sizes = [4, 288], strides = [1, 1]} : vector<4x326xbf16> to vector<4x288xbf16>
    %10 = vector.extract_strided_slice %1 {offsets = [0, 38], sizes = [4, 288], strides = [1, 1]} : vector<4x326xbf16> to vector<4x288xbf16>
    %11 = tpu.concatenate %2, %3, %4, %5, %6, %7, %8, %9, %10 in 0 : vector<4x288xbf16>, vector<4x288xbf16>, vector<4x288xbf16>, vector<4x288xbf16>, vector<4x288xbf16>, vector<4x288xbf16>, vector<4x288xbf16>, vector<4x288xbf16>, vector<4x288xbf16> -> vector<36x288xbf16>
    %c0_2 = arith.constant 0 : index
    %c0_3 = arith.constant 0 : index
    %12 = vector.load %arg2[%c0_2, %c0_3] : memref<8x36xbf16, #tpu.memory_space<vmem>>, vector<8x36xbf16>
    %cst = arith.constant dense<0.000000e+00> : vector<8x288xf32>
    %13 = tpu.matmul %12, %11, %cst {dimension_numbers = #tpu.dot_dimension_numbers<[1], [0], [0], [1], [0, 0, 1, 1], [], []>} : vector<8x36xbf16>, vector<36x288xbf16>, vector<8x288xf32> -> vector<8x288xf32>
    %c0_4 = arith.constant 0 : index
    %c0_5 = arith.constant 0 : index
    %14 = vector.load %arg3[%c0_4, %c0_5] : memref<8x1xf32, #tpu.memory_space<vmem>>, vector<8x1xf32>
    %15 = vector.broadcast %14 : vector<8x1xf32> to vector<8x288xf32>
    %16 = arith.addf %13, %15 : vector<8x288xf32>
    %cst_6 = arith.constant 0.000000e+00 : f32
    %17 = vector.broadcast %cst_6 : f32 to vector<8x288xf32>
    %18 = arith.maximumf %16, %17 : vector<8x288xf32>
    %19 = arith.truncf %18 : vector<8x288xf32> to vector<8x288xbf16>
    %c0_7 = arith.constant 0 : index
    %c0_8 = arith.constant 0 : index
    %c0_9 = arith.constant 0 : index
    %20 = vector.load %arg4[%c0_7, %c0_8, %c0_9] : memref<1x8x288xbf16, #tpu.memory_space<vmem>>, vector<1x8x288xbf16>
    %21 = vector.shape_cast %20 : vector<1x8x288xbf16> to vector<8x288xbf16>
    %22 = vector.shape_cast %19 : vector<8x288xbf16> to vector<1x8x288xbf16>
    tpu.vector_store %arg4[%c0_7, %c0_8, %c0_9], %22 {strides = array<i32>} : memref<1x8x288xbf16, #tpu.memory_space<vmem>>, vector<1x8x288xbf16>,
    return
  }
  func.func @transform_0(%arg0: i32) -> (i32, i32, i32) {
    %c0_i32 = arith.constant 0 : i32
    %c0_i32_0 = arith.constant 0 : i32
    %c0_i32_1 = arith.constant 0 : i32
    return %arg0, %c0_i32, %c0_i32_0 : i32, i32, i32
  }
  func.func @transform_1(%arg0: i32) -> (i32, i32) {
    %c0_i32 = arith.constant 0 : i32
    %c0_i32_0 = arith.constant 0 : i32
    %c0_i32_1 = arith.constant 0 : i32
    return %c0_i32, %c0_i32_0 : i32, i32
  }
  func.func @transform_2(%arg0: i32) -> (i32, i32) {
    %c0_i32 = arith.constant 0 : i32
    %c0_i32_0 = arith.constant 0 : i32
    %c0_i32_1 = arith.constant 0 : i32
    return %c0_i32, %c0_i32_0 : i32, i32
  }
  func.func @transform_3(%arg0: i32) -> (i32, i32, i32) {
    %c0_i32 = arith.constant 0 : i32
    %c0_i32_0 = arith.constant 0 : i32
    %c0_i32_1 = arith.constant 0 : i32
    return %arg0, %c0_i32, %c0_i32_0 : i32, i32, i32
  }
}

</mosaic_0001>

<llo_original>
// kernel: _lambda_.1
$region0: #{_lambda_.1}
  #allocation0 [shape = 'u32[]', space=smem, size = 0x4, offset = 0x4, fixed_abs, tag = 'smem constant byte address 0x4 - core index']
  #allocation1 [shape = 'u32[144,128]{1,0:T(1,128)}', space=vmem, size = 0x12000, scoped, tag = 'internal scratch']
  %s0 = inlined_call_operand.vmem [shape: bf16[2,4,326], index: 0, kind: input, shape index: {}]
  %s1 = inlined_call_operand.vmem [shape: bf16[8,36], index: 1, kind: input, shape index: {}]
  %s2 = inlined_call_operand.vmem [shape: f32[8,1], index: 2, kind: input, shape index: {}]
  %s3 = inlined_call_operand.vmem [shape: bf16[2,8,288], index: 3, kind: output, shape index: {}]
  %s4 = sld [smem:[#allocation0]]
  $region45: #{_lambda_.1} parent=0
    _
  %s6 = ssub.s32 1, %s4
  %s7 = scalar_select 0, %s6, %s4
  loop: start=0, step=1, limit=4
  $region2: #{_lambda_.1} parent=0 // loop_pre_header
    _
  $region3: #{_lambda_.1} parent=0 // loop_header
    %s9 = sphi 0, %s13
    %p10 = scmp.ge.s32.totalorder %s9, 4
    %s19 = sphi 0, %s21
    %s22 = sphi 0, %s19
    %s23 = sphi 0, %s22
    %s39 = sphi 0, %s23
    %s43 = sphi 0, %s43
    %s45 = sphi 0, %s43
    %s46 = sphi 0, %s45
    %s60 = sphi 0, %s46
    %s64 = sphi 0, %s64
    %s66 = sphi 0, %s64
    %s67 = sphi 0, %s66
    %s81 = sphi 0, %s67
    %s87 = sphi 0, %s89
    %s90 = sphi 0, %s87
    %s91 = sphi 0, %s90
    %s107 = sphi 0, %s91
  $region4: #{_lambda_.1} parent=0 // loop_header_branch
    %12 = sbr.rel (%p10) target = $region8
  $region5: #{_lambda_.1} parent=0 // loop_body
    %s14 = ssub.s32 %s9, 1
    %s15 = ssub.s32 %s9, 2
    %s16 = sadd.s32 %s9, 1
    %s17 = ssub.s32 %s9, %s16
    %p18 = scmp.eq.s32.totalorder %s17, 0
    %s20 = sadd.s32 %s19, 1
    %s21 = scalar_select %p18, %s19, %s20
    %p24 = pneg %p18
    %p25 = scmp.eq.s32.totalorder %s9, 1
    %p26 = por %p24, %p25
    %p27 = scmp.ne.s32.totalorder %s19, %s22
    %p28 = scmp.eq.s32.totalorder %s9, 0
    %p29 = por %p27, %p28
    %p30 = scmp.ne.s32.totalorder %s19, %s22
    %p31 = scmp.eq.s32.totalorder %s14, 1
    %p32 = por %p30, %p31
    %p33 = scmp.ne.s32.totalorder %s22, %s23
    %p34 = scmp.eq.s32.totalorder %s14, 0
    %p35 = por %p33, %p34
    %p36 = scmp.ne.s32.totalorder %s22, %s23
    %p37 = scmp.eq.s32.totalorder %s15, 1
    %p38 = por %p36, %p37
    %p40 = scmp.ne.s32.totalorder %s23, %s39
    %p41 = scmp.eq.s32.totalorder %s15, 0
    %p42 = por %p40, %p41
    %s44 = sadd.s32 %s43, 1
    %p47 = scmp.eq.s32.totalorder %s9, 1
    %p48 = scmp.ne.s32.totalorder %s43, %s45
    %p49 = scmp.eq.s32.totalorder %s9, 0
    %p50 = por %p48, %p49
    %p51 = scmp.ne.s32.totalorder %s43, %s45
    %p52 = scmp.eq.s32.totalorder %s14, 1
    %p53 = por %p51, %p52
    %p54 = scmp.ne.s32.totalorder %s45, %s46
    %p55 = scmp.eq.s32.totalorder %s14, 0
    %p56 = por %p54, %p55
    %p57 = scmp.ne.s32.totalorder %s45, %s46
    %p58 = scmp.eq.s32.totalorder %s15, 1
    %p59 = por %p57, %p58
    %p61 = scmp.ne.s32.totalorder %s46, %s60
    %p62 = scmp.eq.s32.totalorder %s15, 0
    %p63 = por %p61, %p62
    %s65 = sadd.s32 %s64, 1
    %p68 = scmp.eq.s32.totalorder %s9, 1
    %p69 = scmp.ne.s32.totalorder %s64, %s66
    %p70 = scmp.eq.s32.totalorder %s9, 0
    %p71 = por %p69, %p70
    %p72 = scmp.ne.s32.totalorder %s64, %s66
    %p73 = scmp.eq.s32.totalorder %s14, 1
    %p74 = por %p72, %p73
    %p75 = scmp.ne.s32.totalorder %s66, %s67
    %p76 = scmp.eq.s32.totalorder %s14, 0
    %p77 = por %p75, %p76
    %p78 = scmp.ne.s32.totalorder %s66, %s67
    %p79 = scmp.eq.s32.totalorder %s15, 1
    %p80 = por %p78, %p79
    %p82 = scmp.ne.s32.totalorder %s67, %s81
    %p83 = scmp.eq.s32.totalorder %s15, 0
    %p84 = por %p82, %p83
    %s85 = ssub.s32 %s9, %s16
    %p86 = scmp.eq.s32.totalorder %s85, 0
    %s88 = sadd.s32 %s87, 1
    %s89 = scalar_select %p86, %s87, %s88
    %p92 = pneg %p86
    %p93 = scmp.eq.s32.totalorder %s9, 1
    %p94 = por %p92, %p93
    %p95 = scmp.ne.s32.totalorder %s87, %s90
    %p96 = scmp.eq.s32.totalorder %s9, 0
    %p97 = por %p95, %p96
    %p98 = scmp.ne.s32.totalorder %s87, %s90
    %p99 = scmp.eq.s32.totalorder %s14, 1
    %p100 = por %p98, %p99
    %p101 = scmp.ne.s32.totalorder %s90, %s91
    %p102 = scmp.eq.s32.totalorder %s14, 0
    %p103 = por %p101, %p102
    %p104 = scmp.ne.s32.totalorder %s90, %s91
    %p105 = scmp.eq.s32.totalorder %s15, 1
    %p106 = por %p104, %p105
    %p108 = scmp.ne.s32.totalorder %s91, %s107
    %p109 = scmp.eq.s32.totalorder %s15, 0
    %p110 = por %p108, %p109
    %p111 = scmp.le.s32.totalorder 1, %s9
    %p112 = scmp.lt.s32.totalorder %s9, 3
    %p113 = pnand %p111, %p112
    %p114 = pneg %p113
    // Predicated region
    $region9: #{_lambda_.1} parent=5 // pred_check
      _
    $region10: #{_lambda_.1} parent=5 // pred_check_branch
      %116 = sbr.rel (%p113) target = $region12
    $region11: #{_lambda_.1} parent=5 // pred_region
      %s117 = ssub.s32 %s9, 1
      // Predicated region
      $region13: #{_lambda_.1} parent=11 // pred_check
        %p118 = pneg %p56
      $region14: #{_lambda_.1} parent=11 // pred_check_branch
        %120 = sbr.rel (%p118) target = $region16
      $region15: #{_lambda_.1} parent=11 // pred_region
        _
      $region16: #{_lambda_.1} parent=11 // pred_fallthru
        _
      // Predicated region
      $region17: #{_lambda_.1} parent=11 // pred_check
        %p121 = pneg %p77
      $region18: #{_lambda_.1} parent=11 // pred_check_branch
        %123 = sbr.rel (%p121) target = $region20
      $region19: #{_lambda_.1} parent=11 // pred_region
        _
      $region20: #{_lambda_.1} parent=11 // pred_fallthru
        _
    $region12: #{_lambda_.1} parent=5 // pred_fallthru
      _
    %p124 = scmp.lt.s32.totalorder %s9, 2
    // Predicated region
    $region21: #{_lambda_.1} parent=5 // pred_check
      %p125 = pneg %p124
    $region22: #{_lambda_.1} parent=5 // pred_check_branch
      %127 = sbr.rel (%p125) target = $region24
    $region23: #{_lambda_.1} parent=5 // pred_region
      // Predicated region
      $region25: #{_lambda_.1} parent=23 // pred_check
        %p128 = pneg %p29
      $region26: #{_lambda_.1} parent=23 // pred_check_branch
        %130 = sbr.rel (%p128) target = $region28
      $region27: #{_lambda_.1} parent=23 // pred_region
        %p131 = scmp.lt.s32.totalorder %s9, 1
        %s132 = scalar_select %p131, %s9, 1
        %s133 = smul.addr %s132, 3
        %s134 = smul.addr %s133, 2
        %s135 = scalar_lea.vmem %s0, %s134
      $region28: #{_lambda_.1} parent=23 // pred_fallthru
        _
    $region24: #{_lambda_.1} parent=5 // pred_fallthru
      _
    %p136 = scmp.le.s32.totalorder 1, %s9
    %p137 = scmp.lt.s32.totalorder %s9, 3
    %p138 = pnand %p136, %p137
    %p139 = pneg %p138
    // Predicated region
    $region29: #{_lambda_.1} parent=5 // pred_check
      _
    $region30: #{_lambda_.1} parent=5 // pred_check_branch
      %141 = sbr.rel (%p138) target = $region32
    $region31: #{_lambda_.1} parent=5 // pred_region
      %s142 = ssub.s32 %s9, 1
      %p143 = scmp.lt.s32.totalorder %s14, 1
      %s144 = scalar_select %p143, %s14, 1
      %s145 = smul.addr %s144, 3
      %s146 = smul.addr %s145, 2
      %s147 = scalar_lea.vmem %s0, %s146
      %p148 = pneg %p35
      %p149 = pneg %p32
      %p150 = pneg %p56
      %p151 = pneg %p53
      %p152 = pneg %p77
      %p153 = pneg %p74
      %p154 = pneg %p103
      %p155 = pneg %p100
      %p156 = scmp.lt.s32.totalorder %s14, 1
      %s157 = scalar_select %p156, %s14, 1
      %s158 = smul.addr %s157, 3
      %s159 = smul.addr %s158, 4
      %s160 = scalar_lea.vmem %s3, %s159
      %p161 = scmp.lt.s32.totalorder %s14, 1
      %s162 = scalar_select %p161, %s14, 1
      %s163 = smul.addr %s162, 3
      %s164 = smul.addr %s163, 2
      %s165 = scalar_lea.vmem %s0, %s164
      %p166 = scmp.lt.s32.totalorder %s14, 1
      %s167 = scalar_select %p166, %s14, 1
      %s168 = smul.addr %s167, 3
      %s169 = smul.addr %s168, 4
      %s170 = scalar_lea.vmem %s3, %s169
      %v172 = vld [vmem:[%s165] sm:$0x3f]
      %v174 = vcombine.high %v172, %v172
      %v176 = vunpack.c.l.s4 1983009808
      %v177 = vunpack.c.0.s8 %v176
      %v178 = vlaneseq
      %v179 = vshrl.u32 %v178, 7
      %v180 = vsub.s32 %v177, %v179
      %v181 = vrot.slane %v172, %v180
      %v183 = vunpack.c.l.s4 1983009808
      %v184 = vunpack.c.0.s8 %v183
      %v185 = vlaneseq
      %v186 = vshrl.u32 %v185, 7
      %v187 = vsub.s32 %v184, %v186
      %v188 = vrot.slane %v174, %v187
      %v189 = vcombine.high %v181, %v181
      %v190 = vcombine.low %v172, %v172
      %v192 = vunpack.c.l.s4 1983009808
      %v193 = vunpack.c.0.s8 %v192
      %v194 = vlaneseq
      %v195 = vshrl.u32 %v194, 7
      %v196 = vsub.s32 %v193, %v195
      %v197 = vrot.slane %v190, %v196
      %v198 = vcombine.high %v197, %v197
      %199 = vrot.lane.b32.xlu0 %v197, 127
      %v200 = vpop.permute.xlu0 %199
      %201 = vrot.lane.b32.xlu0 %v198, 127
      %v202 = vpop.permute.xlu0 %201
      %203 = vrot.lane.b32.xlu0 %v181, 127
      %v204 = vpop.permute.xlu0 %203
      %vm205 = vcmask 1039360
      %v206 = vsel %vm205, %v200, %v202
      %v207 = vsel %vm205, %v202, %v204
      %v208 = vcombine.low %v181, %v181
      %v209 = vcombine.low %v188, %v188
      %210 = vrot.lane.b32.xlu0 %v208, 126
      %v211 = vpop.permute.xlu0 %210
      %212 = vrot.lane.b32.xlu0 %v181, 126
      %v213 = vpop.permute.xlu0 %212
      %214 = vrot.lane.b32.xlu0 %v209, 126
      %v215 = vpop.permute.xlu0 %214
      %vm216 = vcmask 1031168
      %v217 = vsel %vm216, %v211, %v213
      %v218 = vsel %vm216, %v213, %v215
      %v219 = vcombine.low %v197, %v197
      %220 = vrot.lane.b32.xlu0 %v219, 110
      %v221 = vpop.permute.xlu0 %220
      %222 = vrot.lane.b32.xlu0 %v197, 110
      %v223 = vpop.permute.xlu0 %222
      %224 = vrot.lane.b32.xlu0 %v208, 110
      %v225 = vpop.permute.xlu0 %224
      %vm226 = vcmask 900096
      %v227 = vsel %vm226, %v221, %v223
      %v228 = vsel %vm226, %v223, %v225
      %229 = vrot.lane.b32.xlu0 %v181, 109
      %v230 = vpop.permute.xlu0 %229
      %231 = vrot.lane.b32.xlu0 %v189, 109
      %v232 = vpop.permute.xlu0 %231
      %233 = vrot.lane.b32.xlu0 %v188, 109
      %v234 = vpop.permute.xlu0 %233
      %vm235 = vcmask 891904
      %v236 = vsel %vm235, %v230, %v232
      %v237 = vsel %vm235, %v232, %v234
      %238 = vrot.lane.b32.xlu0 %v197, 108
      %v239 = vpop.permute.xlu0 %238
      %240 = vrot.lane.b32.xlu0 %v198, 108
      %v241 = vpop.permute.xlu0 %240
      %242 = vrot.lane.b32.xlu0 %v181, 108
      %v243 = vpop.permute.xlu0 %242
      %vm244 = vcmask 883712
      %v245 = vsel %vm244, %v239, %v241
      %v246 = vsel %vm244, %v241, %v243
      %247 = vrot.lane.b32.xlu0 %v208, 92
      %v248 = vpop.permute.xlu0 %247
      %249 = vrot.lane.b32.xlu0 %v181, 92
      %v250 = vpop.permute.xlu0 %249
      %251 = vrot.lane.b32.xlu0 %v209, 92
      %v252 = vpop.permute.xlu0 %251
      %vm253 = vcmask 752640
      %v254 = vsel %vm253, %v248, %v250
      %v255 = vsel %vm253, %v250, %v252
      %256 = vrot.lane.b32.xlu0 %v219, 91
      %v257 = vpop.permute.xlu0 %256
      %258 = vrot.lane.b32.xlu0 %v197, 91
      %v259 = vpop.permute.xlu0 %258
      %260 = vrot.lane.b32.xlu0 %v208, 91
      %v261 = vpop.permute.xlu0 %260
      %vm262 = vcmask 744448
      %v263 = vsel %vm262, %v257, %v259
      %v264 = vsel %vm262, %v259, %v261
      %265 = vrot.lane.b32.xlu0 %v181, 90
      %v266 = vpop.permute.xlu0 %265
      %267 = vrot.lane.b32.xlu0 %v189, 90
      %v268 = vpop.permute.xlu0 %267
      %269 = vrot.lane.b32.xlu0 %v188, 90
      %v270 = vpop.permute.xlu0 %269
      %vm271 = vcmask 736256
      %v272 = vsel %vm271, %v266, %v268
      %v273 = vsel %vm271, %v268, %v270
      %vm274 = vcmask 1041408
      %v277 = vsel %vm274, %v181, %v206
      %v280 = vsel %vm274, %v189, %v207
      %v283 = vsel %vm274, %v188, %v204
      %vm284 = vcmask 1043456
      %v286 = vsel %vm284, %v277, %v217
      %v288 = vsel %vm284, %v280, %v218
      %v290 = vsel %vm284, %v283, %v215
      %vm291 = vcmask 1045504
      %v293 = vsel %vm291, %v286, %v227
      %v296 = vsel %vm291, %v288, %v228
      %v299 = vsel %vm291, %v290, %v225
      %v303 = vsel %vm274, %v236, %v245
      %v306 = vsel %vm274, %v237, %v246
      %v309 = vsel %vm274, %v234, %v243
      %v311 = vsel %vm284, %v303, %v254
      %v313 = vsel %vm284, %v306, %v255
      %v315 = vsel %vm284, %v309, %v252
      %v317 = vsel %vm291, %v311, %v263
      %v320 = vsel %vm291, %v313, %v264
      %v323 = vsel %vm291, %v315, %v261
      %v325 = vld [vmem:[%s1] sm:$0xf]
      %v326 = vld [vmem:[%s2] sm:$0xff]
      %328 = vset.pattern.permute.xlu0 0
      %329 = vperm.xlu0 %328, %v326
      %v330 = vpop.permute.xlu0 %329
      %vm332 = vcmask 293888
      %v334 = vsel %vm332, %v325, 0
      %v337 = vsel %vm274, %v272, 0
      %v340 = vsel %vm274, %v273, 0
      %v343 = vsel %vm274, %v270, 0
      %345 = vmatprep.subr.bf16.mxu0 %v296
      %346 = vmatpush1.bf16.msra.mxu0 %v293
      %347 = vmatprep.subr.bf16.mxu0 %v320
      %348 = vmatpush1.bf16.msra.mxu0 %v317
      %349 = vmatprep.subr.bf16.mxu0 %v340
      %350 = vmatpush1.bf16.msra.mxu0 %v337
      %351 = vmatprep.subr.bf16.mxu0 0
      %352 = vmatpush1.bf16.msra.mxu0 0
      %353 = vmatprep.subr.bf16.mxu0 0
      %354 = vmatpush1.bf16.msra.mxu0 0
      %355 = vmatprep.subr.bf16.mxu0 0
      %356 = vmatpush1.bf16.msra.mxu0 0
      %357 = vmatprep.subr.bf16.mxu0 0
      %358 = vmatpush1.bf16.msra.mxu0 0
      %359 = vmatprep.subr.bf16.mxu0 0
      %360 = vmatpush1.bf16.msra.mxu0 0
      %361 = vmatprep.subr.bf16.mxu0 0
      %362 = vmatpush1.bf16.msra.mxu0 0
      %363 = vmatprep.subr.bf16.mxu0 0
      %364 = vmatpush1.bf16.msra.mxu0 0
      %365 = vmatprep.subr.bf16.mxu0 0
      %366 = vmatpush1.bf16.msra.mxu0 0
      %367 = vmatprep.subr.bf16.mxu0 0
      %368 = vmatpush1.bf16.msra.mxu0 0
      %369 = vmatprep.subr.bf16.mxu0 0
      %370 = vmatpush1.bf16.msra.mxu0 0
      %371 = vmatprep.subr.bf16.mxu0 0
      %372 = vmatpush1.bf16.msra.mxu0 0
      %373 = vmatprep.subr.bf16.mxu0 0
      %374 = vmatpush1.bf16.msra.mxu0 0
      %375 = vmatprep.subr.bf16.mxu0 0
      %376 = vmatpush1.bf16.msra.mxu0 0
      %377 = vmatprep.mubr.bf16.mxu0 0
      %378 = vmatmul.mubr.bf16.gmra.mrb[0].mxu0 %v334
      %v379 = vpop.f32.mrb[0].mxu0
      %v380 = vadd.f32 %v330, %v379
      %v381 = vpop.f32.mrb[0].mxu0
      %v382 = vadd.f32 %v330, %v381
      %v383 = vpop.f32.mrb[0].mxu0
      %v384 = vpop.f32.mrb[0].mxu0
      %385 = vdwg.mxu0
      %386 = vmatprep.subr.bf16.mxu0 0
      %387 = vmatpush1.bf16.msra.mxu0 %v299
      %388 = vmatprep.subr.bf16.mxu0 0
      %389 = vmatpush1.bf16.msra.mxu0 %v323
      %390 = vmatprep.subr.bf16.mxu0 0
      %391 = vmatpush1.bf16.msra.mxu0 %v343
      %392 = vmatprep.subr.bf16.mxu0 0
      %393 = vmatpush1.bf16.msra.mxu0 0
      %394 = vmatprep.subr.bf16.mxu0 0
      %395 = vmatpush1.bf16.msra.mxu0 0
      %396 = vmatprep.subr.bf16.mxu0 0
      %397 = vmatpush1.bf16.msra.mxu0 0
      %398 = vmatprep.subr.bf16.mxu0 0
      %399 = vmatpush1.bf16.msra.mxu0 0
      %400 = vmatprep.subr.bf16.mxu0 0
      %401 = vmatpush1.bf16.msra.mxu0 0
      %402 = vmatprep.subr.bf16.mxu0 0
      %403 = vmatpush1.bf16.msra.mxu0 0
      %404 = vmatprep.subr.bf16.mxu0 0
      %405 = vmatpush1.bf16.msra.mxu0 0
      %406 = vmatprep.subr.bf16.mxu0 0
      %407 = vmatpush1.bf16.msra.mxu0 0
      %408 = vmatprep.subr.bf16.mxu0 0
      %409 = vmatpush1.bf16.msra.mxu0 0
      %410 = vmatprep.subr.bf16.mxu0 0
      %411 = vmatpush1.bf16.msra.mxu0 0
      %412 = vmatprep.subr.bf16.mxu0 0
      %413 = vmatpush1.bf16.msra.mxu0 0
      %414 = vmatprep.subr.bf16.mxu0 0
      %415 = vmatpush1.bf16.msra.mxu0 0
      %416 = vmatprep.subr.bf16.mxu0 0
      %417 = vmatpush1.bf16.msra.mxu0 0
      %418 = vmatprep.mubr.bf16.mxu0 0
      %419 = vmatmul.mubr.bf16.gmra.mrb[0].mxu0 %v334
      %v420 = vpop.f32.mrb[0].mxu0
      %v421 = vadd.f32 %v330, %v420
      %v422 = vpop.f32.mrb[0].mxu0
      %v423 = vpop.f32.mrb[0].mxu0
      %v424 = vpop.f32.mrb[0].mxu0
      %425 = vdwg.mxu0
      %v426 = vmax.f32 %v380, 0.0
      %v427 = vmax.f32 %v382, 0.0
      %v428 = vmax.f32 %v421, 0.0
      %v429 = vpack.c.bf16 %v426, %v426
      %v430 = vpack.c.bf16 %v427, %v427
      %v431 = vpack.c.bf16 %v428, %v428
      %v435 = vunpack.c.l.b16 %v429
      %v436 = vunpack.c.l.b16 %v430
      %v437 = vunpack.c.l.b16 %v431
      %v438 = vpack.c.b16 %v436, %v435
      %v439 = vpack.c.b16 %v437, %v437
      %442 = vst [vmem:[%s170] sm:$0xff] %v438
      %vm443 = vcmask 257024
      %444 = vst.msk [vmem:[%s170 + $0x8] sm:$0xf] %vm443, %v439
      %p445 = scmp.lt.s32.totalorder %s14, 1
      %s446 = scalar_select %p445, %s14, 1
      %s447 = smul.addr %s446, 3
      %s448 = smul.addr %s447, 4
      %s449 = scalar_lea.vmem %s3, %s448
      // Predicated region
      $region33: #{_lambda_.1} parent=31 // pred_check
        %p450 = pneg %p100
      $region34: #{_lambda_.1} parent=31 // pred_check_branch
        %452 = sbr.rel (%p450) target = $region36
      $region35: #{_lambda_.1} parent=31 // pred_region
        _
      $region36: #{_lambda_.1} parent=31 // pred_fallthru
        _
    $region32: #{_lambda_.1} parent=5 // pred_fallthru
      _
    %p453 = scmp.le.s32.totalorder 2, %s9
    // Predicated region
    $region37: #{_lambda_.1} parent=5 // pred_check
      %p454 = pneg %p453
    $region38: #{_lambda_.1} parent=5 // pred_check_branch
      %456 = sbr.rel (%p454) target = $region40
    $region39: #{_lambda_.1} parent=5 // pred_region
      %s457 = ssub.s32 %s9, 2
      // Predicated region
      $region41: #{_lambda_.1} parent=39 // pred_check
        %p458 = pneg %p106
      $region42: #{_lambda_.1} parent=39 // pred_check_branch
        %460 = sbr.rel (%p458) target = $region44
      $region43: #{_lambda_.1} parent=39 // pred_region
        %p461 = scmp.lt.s32.totalorder %s15, 1
        %s462 = scalar_select %p461, %s15, 1
        %s463 = smul.addr %s462, 3
        %s464 = smul.addr %s463, 4
        %s465 = scalar_lea.vmem %s3, %s464
      $region44: #{_lambda_.1} parent=39 // pred_fallthru
        _
    $region40: #{_lambda_.1} parent=5 // pred_fallthru
      _
  $region6: #{_lambda_.1} parent=0 // loop_footer
    %s13 = sadd.s32 1, %s9
  $region7: #{_lambda_.1} parent=0 // loop_footer_branch
    %8 = sbr.rel target = $region3
  $region8: #{_lambda_.1} parent=0 // loop_exit
    _

</llo_original>
